<compile_context>
chip_gen: v5e
topology: v5e:2x2
jax: 0.10.0
libtpu: 0.0.40
codegen_flags: <defaults>
</compile_context>

<pallas_src>
import functools
from typing import NamedTuple, Optional

import jax
import jax.numpy as jnp
from jax.experimental import pallas as pl
from jax.experimental.pallas import tpu as pltpu


_LANE = 128                      # output last dim padded to a multiple of this
_MAX_TILE_M = 1024               # measured sweet spot for mem-bound tiles
_TILE_K = 512                    # K tile when the weight cannot stay resident
# Conservative, generation-agnostic threshold used at *prep* time: if the
# (transposed, N-padded) weight is below this, keep its K dim un-padded so the
# activation never needs a per-call K pad (the h block just uses the full dim).
_PREP_RESIDENT_MAX_BYTES = 12 * 1024 * 1024


def _round_up(x, m):
    return ((x + m - 1) // m) * m


def _cdiv(a, b):
    return -(-a // b)


def _vmem_capacity_bytes() -> int:
    """Physical VMEM per TensorCore; falls back to the smallest (v7x) value."""
    try:
        info = pltpu.get_tpu_info()
        for name in ("vmem_capacity_bytes", "vmem_size_bytes", "vmem_bytes"):
            v = getattr(info, name, None)
            if v:
                return int(v)
    except Exception:
        pass
    return 64 * 1024 * 1024  # conservative: v7x per-TensorCore capacity


def _vmem_budget():
    """(working budget, scoped vmem_limit_bytes) tuned per generation."""
    cap = _vmem_capacity_bytes()
    # v5e/v6e: 128 MiB physical -> ~64 MiB working budget (well above the
    # 16/32 MiB default scoped limits).  v7x: 64 MiB physical -> ~44 MiB.
    budget = min(int(cap * 0.70), 64 << 20)
    limit = min(int(cap * 0.85), budget + (16 << 20))
    return budget, limit


# ----------------------------- kernels --------------------------------------


def _resident_kernel(h_ref, wt_ref, b_ref, o_ref, *, compute_dtype):
    """Weight fully VMEM-resident: one dot per M tile, no accumulator."""
    x = h_ref[...]
    if compute_dtype is not None and x.dtype != compute_dtype:
        x = x.astype(compute_dtype)          # in-kernel cast, hidden under DMA/MXU
    acc = jnp.dot(x, wt_ref[...], preferred_element_type=jnp.float32)
    o_ref[...] = (acc + b_ref[...]).astype(o_ref.dtype)


def _ktiled_f32out_kernel(h_ref, wt_ref, b_ref, o_ref, *, compute_dtype):
    """K-tiled path, f32 output: accumulate directly into the resident o_ref."""
    k = pl.program_id(1)
    x = h_ref[...]
    if compute_dtype is not None and x.dtype != compute_dtype:
        x = x.astype(compute_dtype)
    part = jnp.dot(x, wt_ref[...], preferred_element_type=jnp.float32)

    @pl.when(k == 0)
    def _first():                            # assign (no zero-init pass), bias fused
        o_ref[...] = part + b_ref[...]

    @pl.when(k > 0)
    def _rest():
        o_ref[...] += part


def _ktiled_scratch_kernel(h_ref, wt_ref, b_ref, o_ref, acc_ref, *, compute_dtype):
    """K-tiled path, narrow output dtype: f32 scratch accumulator."""
    k = pl.program_id(1)
    x = h_ref[...]
    if compute_dtype is not None and x.dtype != compute_dtype:
        x = x.astype(compute_dtype)
    part = jnp.dot(x, wt_ref[...], preferred_element_type=jnp.float32)

    @pl.when(k == 0)
    def _first():
        acc_ref[...] = part                  # assign, not zero-init + +=

    @pl.when(k > 0)
    def _rest():
        acc_ref[...] += part

    @pl.when(k == pl.num_programs(1) - 1)
    def _finalize():
        o_ref[...] = (acc_ref[...] + b_ref[...]).astype(o_ref.dtype)


# --------------------------- parameter prep ---------------------------------


class HShrinkParams(NamedTuple):
    wt: jax.Array       # (k_w, n_pad) transposed, N-(and maybe K-)padded weight
    b: jax.Array        # (1, n_pad)   f32 zero-padded bias row
    h_dim: int          # true output dim (pre-padding)
    h_ori_dim: int      # true input dim (pre-padding)


def prepare_h_shrink_params(weight, bias, compute_dtype=None) -> HShrinkParams:
    """One-time parameter prep (do at param-load time, NOT per forward call).

    weight: (h_dim, h_ori_dim)  -- PyTorch nn.Linear layout
    bias:   (h_dim,)
    Transposes to (h_ori_dim, h_dim) and zero-pads h_dim up to a multiple of
    128 (lane-dense output).  Small weights keep K un-padded (they will be
    VMEM-resident and the activation needs no per-call pad); large weights are
    K-padded once here for the K-tiled streaming path.  Optionally casts the
    weight to `compute_dtype` (e.g. bf16 -- halves weight HBM traffic on all
    generations; MXU is natively bf16 even on v5e).
    """
    h_dim, h_ori_dim = weight.shape
    n_pad = _round_up(h_dim, _LANE)

    wt = weight.T                                        # (h_ori_dim, h_dim), once
    if compute_dtype is not None:
        wt = wt.astype(compute_dtype)
    itemsize = jnp.dtype(wt.dtype).itemsize

    if h_ori_dim * n_pad * itemsize <= _PREP_RESIDENT_MAX_BYTES:
        k_w = h_ori_dim                                  # resident path: K unpadded
    else:
        k_w = _round_up(h_ori_dim, _TILE_K)              # streaming path: pad K once

    if (k_w != h_ori_dim) or (n_pad != h_dim):
        wt = jnp.pad(wt, ((0, k_w - h_ori_dim), (0, n_pad - h_dim)))
    b = bias if n_pad == h_dim else jnp.pad(bias, (0, n_pad - h_dim))
    b2d = b.reshape(1, n_pad).astype(jnp.float32)
    return HShrinkParams(wt=wt, b=b2d, h_dim=h_dim, h_ori_dim=h_ori_dim)


def _choose_tile_m(m, k_block, n_pad, in_itemsize, out_itemsize,
                   resident_wt_bytes, budget, needs_scratch):
    """Pick an M tile from the generation-aware VMEM budget."""
    sublane = 8 if in_itemsize >= 4 else 16
    # Weight (conservatively counted double-buffered) + bias are resident.
    resident = 2 * resident_wt_bytes + 2 * n_pad * 4
    # Per output row: 2x h tile (input dtype), 2x out tile (OUTPUT dtype),
    # plus an f32 accumulator row when the scratch variant is used.
    per_row = (2 * k_block * in_itemsize
               + 2 * n_pad * out_itemsize
               + (n_pad * 4 if needs_scratch else 0))
    avail = max(budget - resident, 1 << 20)
    tile_m = int(avail // per_row)
    tile_m = max(sublane, min(tile_m, _MAX_TILE_M))
    if m > 256:
        # Keep at least 2 M tiles so both v7x TensorCores get work.
        tile_m = min(tile_m, _round_up(_cdiv(m, 2), sublane))
    tile_m = max(sublane, (tile_m // sublane) * sublane)
    tile_m = min(tile_m, _round_up(m, sublane))
    return tile_m


# ------------------------------ forward -------------------------------------


def h_shrink_apply(h, params: HShrinkParams, *, tile_m=None, compute_dtype=None,
                   max_resident_bytes: Optional[int] = None):
    """Fast path: params already prepared by prepare_h_shrink_params().

    h: (..., h_ori_dim)  ->  (..., h_dim)
    """
    wt, b2d, h_dim, h_ori_dim = params
    assert h.shape[-1] == h_ori_dim, "last dim of h must equal h_ori_dim"
    k_w, n_pad = wt.shape

    lead_shape = h.shape[:-1]
    out_dtype = h.dtype
    h2d = h.reshape(-1, h_ori_dim)
    m = h2d.shape[0]

    in_itemsize = jnp.dtype(h2d.dtype).itemsize
    wt_itemsize = jnp.dtype(wt.dtype).itemsize
    out_itemsize = jnp.dtype(out_dtype).itemsize

    # bf16 weight -> cast the activation tile inside the kernel (never a
    # separate wrapper-side XLA pass over h).
    if compute_dtype is None and wt_itemsize < in_itemsize:
        compute_dtype = wt.dtype

    budget, vmem_limit = _vmem_budget()
    if max_resident_bytes is None:
        max_resident_bytes = budget // 3
    wt_bytes = k_w * n_pad * wt_itemsize

    if wt_bytes <= max_resident_bytes:
        # ---------------- weight-resident path (common case) ----------------
        if k_w != h_ori_dim:                 # only if prep K-padded the weight
            h2d = jnp.pad(h2d, ((0, 0), (0, k_w - h_ori_dim)))
        if tile_m is None:
            tile_m = _choose_tile_m(m, k_w, n_pad, in_itemsize, out_itemsize,
                                    wt_bytes, budget, needs_scratch=False)
        m_tiles = _cdiv(m, tile_m)           # ragged last tile handled by Pallas

        cost = pl.CostEstimate(
            flops=2 * m * k_w * n_pad,
            transcendentals=0,
            bytes_accessed=(m * k_w * in_itemsize + wt_bytes
                            + m * n_pad * out_itemsize))

        out = pl.pallas_call(
            functools.partial(_resident_kernel, compute_dtype=compute_dtype),
            out_shape=jax.ShapeDtypeStruct((m, n_pad), out_dtype),
            grid_spec=pltpu.PrefetchScalarGridSpec(
                num_scalar_prefetch=0,
                grid=(m_tiles,),
                in_specs=[
                    pl.BlockSpec((tile_m, k_w), lambda i: (i, 0)),
                    pl.BlockSpec((k_w, n_pad), lambda i: (0, 0)),   # resident
                    pl.BlockSpec((1, n_pad), lambda i: (0, 0)),
                ],
                out_specs=pl.BlockSpec((tile_m, n_pad), lambda i: (i, 0)),
            ),
            compiler_params=pltpu.CompilerParams(
                dimension_semantics=("parallel",),
                vmem_limit_bytes=vmem_limit),
            cost_estimate=cost,
        )(h2d, wt, b2d)
    else:
        # ------------------- K-tiled streaming path (huge K) ----------------
        tile_k = min(_TILE_K, k_w)
        k_pad = _round_up(k_w, tile_k)
        wt_k = wt if k_pad == k_w else jnp.pad(wt, ((0, k_pad - k_w), (0, 0)))
        if k_pad != h_ori_dim:               # K padding is numerically required
            h2d = jnp.pad(h2d, ((0, 0), (0, k_pad - h_ori_dim)))

        f32_out = jnp.dtype(out_dtype) == jnp.dtype(jnp.float32)
        if tile_m is None:
            tile_m = _choose_tile_m(m, tile_k, n_pad, in_itemsize, out_itemsize,
                                    tile_k * n_pad * wt_itemsize, budget,
                                    needs_scratch=not f32_out)
        m_tiles = _cdiv(m, tile_m)
        k_tiles = k_pad // tile_k

        cost = pl.CostEstimate(
            flops=2 * m * k_pad * n_pad,
            transcendentals=0,
            bytes_accessed=(m * k_pad * in_itemsize
                            + m_tiles * k_pad * n_pad * wt_itemsize  # per M tile
                            + m * n_pad * out_itemsize))

        if f32_out:
            kernel = functools.partial(_ktiled_f32out_kernel,
                                       compute_dtype=compute_dtype)
            scratch = []
        else:
            kernel = functools.partial(_ktiled_scratch_kernel,
                                       compute_dtype=compute_dtype)
            scratch = [pltpu.VMEM((tile_m, n_pad), jnp.float32)]

        out = pl.pallas_call(
            kernel,
            out_shape=jax.ShapeDtypeStruct((m, n_pad), out_dtype),
            grid_spec=pltpu.PrefetchScalarGridSpec(
                num_scalar_prefetch=0,
                grid=(m_tiles, k_tiles),
                in_specs=[
                    pl.BlockSpec((tile_m, tile_k), lambda i, kk: (i, kk)),
                    pl.BlockSpec((tile_k, n_pad), lambda i, kk: (kk, 0)),
                    pl.BlockSpec((1, n_pad), lambda i, kk: (0, 0)),
                ],
                out_specs=pl.BlockSpec((tile_m, n_pad), lambda i, kk: (i, 0)),
                scratch_shapes=scratch,
            ),
            compiler_params=pltpu.CompilerParams(
                dimension_semantics=("parallel", "arbitrary"),
                vmem_limit_bytes=vmem_limit),
            cost_estimate=cost,
        )(h2d, wt_k, b2d)

    out = out[:, :h_dim]                     # drop N padding (M was never padded)
    return out.reshape(*lead_shape, h_dim)


def h_shrink_transform(h, weight, bias, *, tile_m=None):
    """Convenience wrapper taking PyTorch-layout params. For repeated calls,
    prefer prepare_h_shrink_params() once + h_shrink_apply()."""
    params = prepare_h_shrink_params(weight, bias)
    return h_shrink_apply(h, params, tile_m=tile_m)


def init_h_shrink_params(key, h_ori_dim, h_dim, dtype=jnp.float32):
    """Deterministic init mirroring nn.Linear's default
    (uniform(-1/sqrt(fan_in), 1/sqrt(fan_in)) for both weight and bias)."""
    kw, kb = jax.random.split(key)
    bound = 1.0 / (h_ori_dim ** 0.5)
    weight = jax.random.uniform(kw, (h_dim, h_ori_dim), dtype,
                                minval=-bound, maxval=bound)
    bias = jax.random.uniform(kb, (h_dim,), dtype,
                              minval=-bound, maxval=bound)
    return weight, bias


if __name__ == "__main__":
    key = jax.random.PRNGKey(0)
    k_in, k_params = jax.random.split(key)

    # --- small demo shapes matching the module: y = h @ W.T + b -------------
    batch, h_ori_dim, h_dim = 8, 32, 16
    h = jax.random.normal(k_in, (batch, h_ori_dim), dtype=jnp.float32)
    weight, bias = init_h_shrink_params(k_params, h_ori_dim, h_dim)
    y_ref = h @ weight.T + bias

    # 1) f32 weight-resident path.
    params = prepare_h_shrink_params(weight, bias)
    y = jax.block_until_ready(h_shrink_apply(h, params))
    assert y.shape == (batch, h_dim)
    assert jnp.allclose(y, y_ref, atol=1e-2, rtol=1e-2)

    # 2) bf16-weight resident path (weight DMA'd once in bf16, activation tile
    #    cast in-kernel, f32 MXU accumulation, f32 bias epilogue).
    params_bf16 = prepare_h_shrink_params(weight, bias, compute_dtype=jnp.bfloat16)
    y_bf16 = jax.block_until_ready(h_shrink_apply(h, params_bf16))
    assert jnp.allclose(y_bf16, y_ref, atol=3e-2, rtol=3e-2)

    # 3) Force the K-tiled path (normally only used for very large h_ori_dim),
    #    f32 output -> accumulate directly into o_ref (no scratch).
    k_big, m_big, n_big = 1024, 16, 24
    h2 = jax.random.normal(jax.random.PRNGKey(1), (m_big, k_big), dtype=jnp.float32)
    w2, b2 = init_h_shrink_params(jax.random.PRNGKey(2), k_big, n_big)
    p2 = prepare_h_shrink_params(w2, b2)
    y2 = jax.block_until_ready(h_shrink_apply(h2, p2, max_resident_bytes=0))
    y2_ref = h2 @ w2.T + b2
    assert y2.shape == (m_big, n_big)
    assert jnp.allclose(y2, y2_ref, atol=2e-2, rtol=2e-2)

    # 4) K-tiled path with a narrow (bf16) output dtype -> f32 scratch variant.
    h2_bf16 = h2.astype(jnp.bfloat16)
    y3 = jax.block_until_ready(h_shrink_apply(h2_bf16, p2, max_resident_bytes=0))
    y3_ref = h2_bf16.astype(jnp.float32) @ w2.T + b2
    assert jnp.allclose(y3.astype(jnp.float32), y3_ref, atol=5e-2, rtol=5e-2)

    print("KERNEL_OK")
</pallas_src>

<mosaic_0001>
module attributes {stable_mosaic.version = 11 : i64} {
  func.func @_resident_kernel(%arg0: i32, %arg1: memref<8x32xf32, #tpu.memory_space<vmem>>, %arg2: memref<32x128xf32, #tpu.memory_space<vmem>>, %arg3: memref<1x128xf32, #tpu.memory_space<vmem>>, %arg4: memref<8x128xf32, #tpu.memory_space<vmem>>) attributes {dimension_semantics = [#tpu.dimension_semantics<parallel>], iteration_bounds = array<i64: 1>, scalar_prefetch = 0 : i64, scratch_operands = 0 : i64, tpu.core_type = #tpu.core_type<tc>, window_params = [{transform_indices = @transform_0, window_bounds = array<i64: 8, 32>}, {pipeline_mode = #tpu.pipeline_mode<synchronous>, transform_indices = @transform_1, window_bounds = array<i64: 32, 128>}, {pipeline_mode = #tpu.pipeline_mode<synchronous>, transform_indices = @transform_2, window_bounds = array<i64: 1, 128>}, {transform_indices = @transform_3, window_bounds = array<i64: 8, 128>}]} {
    %c0 = arith.constant 0 : index
    %c0_0 = arith.constant 0 : index
    %0 = vector.load %arg1[%c0, %c0_0] : memref<8x32xf32, #tpu.memory_space<vmem>>, vector<8x32xf32>
    %c0_1 = arith.constant 0 : index
    %c0_2 = arith.constant 0 : index
    %1 = vector.load %arg2[%c0_1, %c0_2] : memref<32x128xf32, #tpu.memory_space<vmem>>, vector<32x128xf32>
    %cst = arith.constant dense<0.000000e+00> : vector<8x128xf32>
    %2 = tpu.matmul %0, %1, %cst {dimension_numbers = #tpu.dot_dimension_numbers<[1], [0], [0], [1], [0, 0, 1, 1], [], []>} : vector<8x32xf32>, vector<32x128xf32>, vector<8x128xf32> -> vector<8x128xf32>
    %c0_3 = arith.constant 0 : index
    %c0_4 = arith.constant 0 : index
    %3 = vector.load %arg3[%c0_3, %c0_4] : memref<1x128xf32, #tpu.memory_space<vmem>>, vector<1x128xf32>
    %4 = vector.broadcast %3 : vector<1x128xf32> to vector<8x128xf32>
    %5 = arith.addf %2, %4 : vector<8x128xf32>
    %c0_5 = arith.constant 0 : index
    %c0_6 = arith.constant 0 : index
    %6 = vector.load %arg4[%c0_5, %c0_6] : memref<8x128xf32, #tpu.memory_space<vmem>>, vector<8x128xf32>
    tpu.vector_store %arg4[%c0_5, %c0_6], %5 {strides = array<i32>} : memref<8x128xf32, #tpu.memory_space<vmem>>, vector<8x128xf32>,
    return
  }
  func.func @transform_0(%arg0: i32) -> (i32, i32) {
    %c0_i32 = arith.constant 0 : i32
    %c0_i32_0 = arith.constant 0 : i32
    return %arg0, %c0_i32 : i32, i32
  }
  func.func @transform_1(%arg0: i32) -> (i32, i32) {
    %c0_i32 = arith.constant 0 : i32
    %c0_i32_0 = arith.constant 0 : i32
    %c0_i32_1 = arith.constant 0 : i32
    return %c0_i32, %c0_i32_0 : i32, i32
  }
  func.func @transform_2(%arg0: i32) -> (i32, i32) {
    %c0_i32 = arith.constant 0 : i32
    %c0_i32_0 = arith.constant 0 : i32
    %c0_i32_1 = arith.constant 0 : i32
    return %c0_i32, %c0_i32_0 : i32, i32
  }
  func.func @transform_3(%arg0: i32) -> (i32, i32) {
    %c0_i32 = arith.constant 0 : i32
    %c0_i32_0 = arith.constant 0 : i32
    return %arg0, %c0_i32 : i32, i32
  }
}

</mosaic_0001>

<llo_original>
// kernel: tpu_custom_call.1
$region0: #{tpu_custom_call.1}
  #allocation0 [shape = 'u32[]', space=smem, size = 0x4, offset = 0x4, fixed_abs, tag = 'smem constant byte address 0x4 - core index']
  #allocation1 [shape = 'u32[72,128]{1,0:T(1,128)}', space=vmem, size = 0x9000, scoped, tag = 'internal scratch']
  %s0 = inlined_call_operand.hbm [shape: f32[8,32], index: 0, kind: input, shape index: {}]
  %s1 = inlined_call_operand.hbm [shape: f32[32,128], index: 1, kind: input, shape index: {}]
  %s2 = inlined_call_operand.vmem [shape: f32[1,128], index: 2, kind: input, shape index: {}]
  %s3 = inlined_call_operand.hbm [shape: f32[8,128], index: 3, kind: output, shape index: {}]
  %s4 = sld [smem:[#allocation0]]
  $region30: #{tpu_custom_call.1} parent=0
    _
  %s6 = ssub.s32 1, %s4
  %s7 = scalar_select 0, %s6, %s4
  $region1: #{tpu_custom_call.1} parent=0
    #allocation2 [shape = 'u8[4096]{0}', space=vmem, size = 0x1000, scoped, tag = 'input window, operand 0, single buffered']
    #allocation3 [shape = 's32[1]{0}', space=sflag, size = 0x4, scoped, tag = 'scoped memory for tpu_custom_call.1']
    #allocation4 [shape = 's32[1]{0}', space=sflag, size = 0x4, scoped, tag = 'scoped memory for tpu_custom_call.1']
    #allocation5 [shape = 'u8[16384]{0}', space=vmem, size = 0x4000, scoped, tag = 'input window, operand 1, single buffered']
    #allocation6 [shape = 's32[1]{0}', space=sflag, size = 0x4, scoped, tag = 'scoped memory for tpu_custom_call.1']
    #allocation7 [shape = 'u8[4096]{0}', space=vmem, size = 0x1000, scoped, tag = 'output window, operand 0, single buffered']
    %8 = vsyncpa [#allocation3], 0
    %9 = vsyncpa [#allocation6], 0
    %10 = vsyncpa [#allocation4], 0
    // Predicated region
    $region2: #{tpu_custom_call.1} parent=1 // pred_check
      _
    $region3: #{tpu_custom_call.1} parent=1 // pred_check_branch
      %12 = sbr.rel (0) target = $region5
    $region4: #{tpu_custom_call.1} parent=1 // pred_region
      %14 = vsyncadd [#allocation3], 0
      %s16 = sshll.u32 %s0, 4
      %s17 = int_to_ptr.hbm [resolvable:$true] %s16
      %s18 = sshll.u32 [#allocation2], 4
      %s19 = int_to_ptr.vmem [resolvable:$true] %s18
      %21 = dma.hbm_to_vmem [thread:$0]  %s17, 128, %s19, [#allocation3]
    $region5: #{tpu_custom_call.1} parent=1 // pred_fallthru
      _
    // Predicated region
    $region6: #{tpu_custom_call.1} parent=1 // pred_check
      _
    $region7: #{tpu_custom_call.1} parent=1 // pred_check_branch
      %23 = sbr.rel (0) target = $region9
    $region8: #{tpu_custom_call.1} parent=1 // pred_region
      %25 = vsyncadd [#allocation6], 0
      %s26 = sshll.u32 %s1, 4
      %s27 = int_to_ptr.hbm [resolvable:$true] %s26
      %s28 = sshll.u32 [#allocation5], 4
      %s29 = int_to_ptr.vmem [resolvable:$true] %s28
      %34 = dma.hbm_to_vmem [thread:$0]  %s27, 512, %s29, [#allocation6], 128, 128, 8
    $region9: #{tpu_custom_call.1} parent=1 // pred_fallthru
      _
    // Predicated region
    $region10: #{tpu_custom_call.1} parent=1 // pred_check
      _
    $region11: #{tpu_custom_call.1} parent=1 // pred_check_branch
      %36 = sbr.rel (0) target = $region13
    $region12: #{tpu_custom_call.1} parent=1 // pred_region
      _
    $region13: #{tpu_custom_call.1} parent=1 // pred_fallthru
      _
    // Predicated region
    $region14: #{tpu_custom_call.1} parent=1 // pred_check
      _
    $region15: #{tpu_custom_call.1} parent=1 // pred_check_branch
      %38 = sbr.rel (0) target = $region17
    $region16: #{tpu_custom_call.1} parent=1 // pred_region
      %40 = dma.done [#allocation3], 128
    $region17: #{tpu_custom_call.1} parent=1 // pred_fallthru
      _
    // Predicated region
    $region18: #{tpu_custom_call.1} parent=1 // pred_check
      _
    $region19: #{tpu_custom_call.1} parent=1 // pred_check_branch
      %42 = sbr.rel (0) target = $region21
    $region20: #{tpu_custom_call.1} parent=1 // pred_region
      %44 = dma.done [#allocation6], 512
    $region21: #{tpu_custom_call.1} parent=1 // pred_fallthru
      _
    %v45 = vld [vmem:[#allocation2] sm:$0xff]
    %v46 = vld [vmem:[#allocation5] sm:$0xff]
    %v47 = vld [vmem:[#allocation5 + $0x8] sm:$0xff]
    %v48 = vld [vmem:[#allocation5 + $0x10] sm:$0xff]
    %v49 = vld [vmem:[#allocation5 + $0x18] sm:$0xff]
    %v50 = vld [vmem:[%s2] sm:$0x1]
    %v52 = vperm.slane %v50, 0
    %vm54 = vcmask 261120
    %v56 = vsel %vm54, %v45, 0
    %58 = vmatpush.msra.mxu0 0.0
    %59 = vmatpush.msra.mxu0 0.0
    %60 = vmatpush.msra.mxu0 0.0
    %61 = vmatpush.msra.mxu0 0.0
    %62 = vmatpush.msra.mxu0 0.0
    %63 = vmatpush.msra.mxu0 0.0
    %64 = vmatpush.msra.mxu0 0.0
    %65 = vmatpush.msra.mxu0 0.0
    %66 = vmatpush.msra.mxu0 0.0
    %67 = vmatpush.msra.mxu0 0.0
    %68 = vmatpush.msra.mxu0 0.0
    %69 = vmatpush.msra.mxu0 0.0
    %70 = vmatpush.msra.mxu0 %v49
    %71 = vmatpush.msra.mxu0 %v48
    %72 = vmatpush.msra.mxu0 %v47
    %73 = vmatpush.msra.mxu0 %v46
    %74 = vmatmul.f32.gmra.mxu0 %v56
    %v75 = vpop.f32.mrf.mxu0
    %v76 = vadd.f32 %v52, %v75
    %77 = vdwg.mxu0
    %78 = vst [vmem:[#allocation7] sm:$0xff] %v76
    // Predicated region
    $region22: #{tpu_custom_call.1} parent=1 // pred_check
      _
    $region23: #{tpu_custom_call.1} parent=1 // pred_check_branch
      %80 = sbr.rel (0) target = $region25
    $region24: #{tpu_custom_call.1} parent=1 // pred_region
      %82 = vsyncadd [#allocation4], 0
      %s84 = sshll.u32 [#allocation7], 4
      %s85 = int_to_ptr.vmem [resolvable:$true] %s84
      %s86 = sshll.u32 %s3, 4
      %s87 = int_to_ptr.hbm [resolvable:$true] %s86
      %89 = dma.vmem_to_hbm [thread:$0]  %s85, 128, %s87, [#allocation4]
    $region25: #{tpu_custom_call.1} parent=1 // pred_fallthru
      _
    // Predicated region
    $region26: #{tpu_custom_call.1} parent=1 // pred_check
      _
    $region27: #{tpu_custom_call.1} parent=1 // pred_check_branch
      %91 = sbr.rel (0) target = $region29
    $region28: #{tpu_custom_call.1} parent=1 // pred_region
      %93 = dma.done [#allocation4], 128
    $region29: #{tpu_custom_call.1} parent=1 // pred_fallthru
      _
    %94 = vsyncpa [#allocation3], 1
    %95 = vsyncpa [#allocation6], 1
    %96 = vsyncpa [#allocation4], 1

</llo_original>
